<compile_context>
chip_gen: v7x
topology: tpu7x:2x2x1
jax: 0.10.0
libtpu: 0.0.40
codegen_flags: <defaults>
</compile_context>

<pallas_src>
import functools

import jax
import jax.numpy as jnp
from jax.experimental import pallas as pl
from jax.experimental.pallas import tpu as pltpu


def _round_up(n, m):
    return ((n + m - 1) // m) * m


def _mlp_kernel(x_ref, w1_ref, b1_ref, w2_ref, b2_ref, w3_ref, b3_ref, o_ref):
    # x_ref: (3, TB) lane-major batch tile; everything below stays lane-dense.
    x = x_ref[...]                                                            # (3, TB)
    h1 = jnp.dot(w1_ref[...], x, preferred_element_type=jnp.float32)         # (16, TB)
    h1 = jnp.maximum(h1 + b1_ref[...], 0.0)                                   # relu
    h2 = jnp.dot(w2_ref[...], h1, preferred_element_type=jnp.float32)        # (8, TB)
    h2 = jnp.maximum(h2 + b2_ref[...], 0.0)                                   # relu
    z3 = jnp.dot(w3_ref[...], h2, preferred_element_type=jnp.float32)        # (1, TB)
    z3 = z3 + b3_ref[...]
    o_ref[...] = jax.nn.sigmoid(z3)                                           # exp -> EUP


@functools.partial(jax.jit, static_argnames=("tile_b",))
def irrigation_nn_forward(x, params, *, tile_b=8192):
    """x: (B, 3) float32. params: PyTorch-convention weights (out, in), biases (out, 1)."""
    B = x.shape[0]
    # Large lane-dense batch tile; per-step overhead amortized, still tiny in VMEM.
    TB = min(tile_b, _round_up(B, 128))
    B_pad = _round_up(B, TB)
    grid = (B_pad // TB,)

    # Transpose to (3, B) and zero-pad the batch up to a tile multiple.
    x_t = jnp.zeros((3, B_pad), jnp.float32).at[:, :B].set(x.T)

    # Whole-array, grid-invariant blocks for weights/biases (stay resident in VMEM).
    def const_spec(shape):
        return pl.BlockSpec(shape, lambda i: (0, 0))

    out_t = pl.pallas_call(
        _mlp_kernel,
        out_shape=jax.ShapeDtypeStruct((1, B_pad), jnp.float32),
        grid=grid,
        in_specs=[
            pl.BlockSpec((3, TB), lambda i: (0, i)),      # x tile: batch on lanes
            const_spec((16, 3)),                          # w1
            const_spec((16, 1)),                          # b1
            const_spec((8, 16)),                          # w2
            const_spec((8, 1)),                           # b2
            const_spec((1, 8)),                           # w3
            const_spec((1, 1)),                           # b3
        ],
        out_specs=pl.BlockSpec((1, TB), lambda i: (0, i)),
        compiler_params=pltpu.CompilerParams(
            dimension_semantics=("parallel",),            # lets v7x shard tiles over 2 TCs
        ),
        cost_estimate=pl.CostEstimate(
            flops=2 * B_pad * (3 * 16 + 16 * 8 + 8 * 1),
            transcendentals=B_pad,
            bytes_accessed=16 * B_pad,                    # 12 B in + 4 B out per sample
        ),
    )(
        x_t,
        params["w1"], params["b1"],
        params["w2"], params["b2"],
        params["w3"], params["b3"],
    )

    # (1, B_pad) -> (B, 1), dropping padded columns.
    return out_t[:, :B].T


def init_params(key):
    """Deterministic init matching nn.Linear: W is (out, in), b is (out, 1)."""
    ks = jax.random.split(key, 6)

    def uniform_linear(kw, kb, fan_in, fan_out):
        # PyTorch nn.Linear default init: U(-1/sqrt(fan_in), 1/sqrt(fan_in))
        bound = 1.0 / jnp.sqrt(jnp.float32(fan_in))
        w = jax.random.uniform(kw, (fan_out, fan_in), jnp.float32, -bound, bound)
        b = jax.random.uniform(kb, (fan_out, 1), jnp.float32, -bound, bound)
        return w, b

    w1, b1 = uniform_linear(ks[0], ks[1], 3, 16)
    w2, b2 = uniform_linear(ks[2], ks[3], 16, 8)
    w3, b3 = uniform_linear(ks[4], ks[5], 8, 1)
    return {"w1": w1, "b1": b1, "w2": w2, "b2": b2, "w3": w3, "b3": b3}


def _reference(x, p):
    h1 = jnp.maximum(x @ p["w1"].T + p["b1"].T, 0.0)
    h2 = jnp.maximum(h1 @ p["w2"].T + p["b2"].T, 0.0)
    return jax.nn.sigmoid(h2 @ p["w3"].T + p["b3"].T)


if __name__ == "__main__":
    key = jax.random.PRNGKey(0)
    k_x, k_p = jax.random.split(key)

    batch = 8
    x = jax.random.uniform(k_x, (batch, 3), jnp.float32)  # soil moisture, temp, humidity
    params = init_params(k_p)

    out = irrigation_nn_forward(x, params)
    out = jax.block_until_ready(out)

    ref = _reference(x, params)
    assert out.shape == (batch, 1)
    assert jnp.allclose(out, ref, atol=1e-5, rtol=1e-5)

    print("KERNEL_OK")
</pallas_src>

<mosaic_0001>
module attributes {stable_mosaic.version = 11 : i64} {
  func.func @_mlp_kernel(%arg0: i32, %arg1: memref<3x128xf32, #tpu.memory_space<vmem>>, %arg2: memref<16x3xf32, #tpu.memory_space<vmem>>, %arg3: memref<16x1xf32, #tpu.memory_space<vmem>>, %arg4: memref<8x16xf32, #tpu.memory_space<vmem>>, %arg5: memref<8x1xf32, #tpu.memory_space<vmem>>, %arg6: memref<1x8xf32, #tpu.memory_space<vmem>>, %arg7: memref<1x1xf32, #tpu.memory_space<vmem>>, %arg8: memref<1x128xf32, #tpu.memory_space<vmem>>) attributes {dimension_semantics = [#tpu.dimension_semantics<parallel>], iteration_bounds = array<i64: 1>, scalar_prefetch = 0 : i64, scratch_operands = 0 : i64, tpu.core_type = #tpu.core_type<tc>, window_params = [{transform_indices = @transform_0, window_bounds = array<i64: 3, 128>}, {pipeline_mode = #tpu.pipeline_mode<synchronous>, transform_indices = @transform_1, window_bounds = array<i64: 16, 3>}, {pipeline_mode = #tpu.pipeline_mode<synchronous>, transform_indices = @transform_2, window_bounds = array<i64: 16, 1>}, {pipeline_mode = #tpu.pipeline_mode<synchronous>, transform_indices = @transform_3, window_bounds = array<i64: 8, 16>}, {pipeline_mode = #tpu.pipeline_mode<synchronous>, transform_indices = @transform_4, window_bounds = array<i64: 8, 1>}, {pipeline_mode = #tpu.pipeline_mode<synchronous>, transform_indices = @transform_5, window_bounds = array<i64: 1, 8>}, {pipeline_mode = #tpu.pipeline_mode<synchronous>, transform_indices = @transform_6, window_bounds = array<i64: 1, 1>}, {transform_indices = @transform_7, window_bounds = array<i64: 1, 128>}]} {
    %c0 = arith.constant 0 : index
    %c0_0 = arith.constant 0 : index
    %0 = vector.load %arg1[%c0, %c0_0] : memref<3x128xf32, #tpu.memory_space<vmem>>, vector<3x128xf32>
    %c0_1 = arith.constant 0 : index
    %c0_2 = arith.constant 0 : index
    %1 = vector.load %arg2[%c0_1, %c0_2] : memref<16x3xf32, #tpu.memory_space<vmem>>, vector<16x3xf32>
    %cst = arith.constant dense<0.000000e+00> : vector<16x128xf32>
    %2 = tpu.matmul %1, %0, %cst {dimension_numbers = #tpu.dot_dimension_numbers<[1], [0], [0], [1], [0, 0, 1, 1], [], []>} : vector<16x3xf32>, vector<3x128xf32>, vector<16x128xf32> -> vector<16x128xf32>
    %c0_3 = arith.constant 0 : index
    %c0_4 = arith.constant 0 : index
    %3 = vector.load %arg3[%c0_3, %c0_4] : memref<16x1xf32, #tpu.memory_space<vmem>>, vector<16x1xf32>
    %4 = vector.broadcast %3 : vector<16x1xf32> to vector<16x128xf32>
    %5 = arith.addf %2, %4 : vector<16x128xf32>
    %cst_5 = arith.constant 0.000000e+00 : f32
    %6 = vector.broadcast %cst_5 : f32 to vector<16x128xf32>
    %7 = arith.maximumf %5, %6 : vector<16x128xf32>
    %c0_6 = arith.constant 0 : index
    %c0_7 = arith.constant 0 : index
    %8 = vector.load %arg4[%c0_6, %c0_7] : memref<8x16xf32, #tpu.memory_space<vmem>>, vector<8x16xf32>
    %cst_8 = arith.constant dense<0.000000e+00> : vector<8x128xf32>
    %9 = tpu.matmul %8, %7, %cst_8 {dimension_numbers = #tpu.dot_dimension_numbers<[1], [0], [0], [1], [0, 0, 1, 1], [], []>} : vector<8x16xf32>, vector<16x128xf32>, vector<8x128xf32> -> vector<8x128xf32>
    %c0_9 = arith.constant 0 : index
    %c0_10 = arith.constant 0 : index
    %10 = vector.load %arg5[%c0_9, %c0_10] : memref<8x1xf32, #tpu.memory_space<vmem>>, vector<8x1xf32>
    %11 = vector.broadcast %10 : vector<8x1xf32> to vector<8x128xf32>
    %12 = arith.addf %9, %11 : vector<8x128xf32>
    %cst_11 = arith.constant 0.000000e+00 : f32
    %13 = vector.broadcast %cst_11 : f32 to vector<8x128xf32>
    %14 = arith.maximumf %12, %13 : vector<8x128xf32>
    %c0_12 = arith.constant 0 : index
    %c0_13 = arith.constant 0 : index
    %15 = vector.load %arg6[%c0_12, %c0_13] : memref<1x8xf32, #tpu.memory_space<vmem>>, vector<1x8xf32>
    %cst_14 = arith.constant dense<0.000000e+00> : vector<1x128xf32>
    %16 = tpu.matmul %15, %14, %cst_14 {dimension_numbers = #tpu.dot_dimension_numbers<[1], [0], [0], [1], [0, 0, 1, 1], [], []>} : vector<1x8xf32>, vector<8x128xf32>, vector<1x128xf32> -> vector<1x128xf32>
    %c0_15 = arith.constant 0 : index
    %c0_16 = arith.constant 0 : index
    %17 = vector.load %arg7[%c0_15, %c0_16] : memref<1x1xf32, #tpu.memory_space<vmem>>, vector<1x1xf32>
    %18 = vector.broadcast %17 : vector<1x1xf32> to vector<1x128xf32>
    %19 = arith.addf %16, %18 : vector<1x128xf32>
    %20 = arith.negf %19 : vector<1x128xf32>
    %21 = math.exp %20 : vector<1x128xf32>
    %cst_17 = arith.constant 1.000000e+00 : f32
    %22 = vector.broadcast %cst_17 : f32 to vector<1x128xf32>
    %23 = arith.addf %22, %21 : vector<1x128xf32>
    %24 = arith.divf %22, %23 : vector<1x128xf32>
    %c0_18 = arith.constant 0 : index
    %c0_19 = arith.constant 0 : index
    %25 = vector.load %arg8[%c0_18, %c0_19] : memref<1x128xf32, #tpu.memory_space<vmem>>, vector<1x128xf32>
    tpu.vector_store %arg8[%c0_18, %c0_19], %24 {strides = array<i32>} : memref<1x128xf32, #tpu.memory_space<vmem>>, vector<1x128xf32>,
    return
  }
  func.func @transform_0(%arg0: i32) -> (i32, i32) {
    %c0_i32 = arith.constant 0 : i32
    %c0_i32_0 = arith.constant 0 : i32
    return %c0_i32, %arg0 : i32, i32
  }
  func.func @transform_1(%arg0: i32) -> (i32, i32) {
    %c0_i32 = arith.constant 0 : i32
    %c0_i32_0 = arith.constant 0 : i32
    %c0_i32_1 = arith.constant 0 : i32
    return %c0_i32, %c0_i32_0 : i32, i32
  }
  func.func @transform_2(%arg0: i32) -> (i32, i32) {
    %c0_i32 = arith.constant 0 : i32
    %c0_i32_0 = arith.constant 0 : i32
    %c0_i32_1 = arith.constant 0 : i32
    return %c0_i32, %c0_i32_0 : i32, i32
  }
  func.func @transform_3(%arg0: i32) -> (i32, i32) {
    %c0_i32 = arith.constant 0 : i32
    %c0_i32_0 = arith.constant 0 : i32
    %c0_i32_1 = arith.constant 0 : i32
    return %c0_i32, %c0_i32_0 : i32, i32
  }
  func.func @transform_4(%arg0: i32) -> (i32, i32) {
    %c0_i32 = arith.constant 0 : i32
    %c0_i32_0 = arith.constant 0 : i32
    %c0_i32_1 = arith.constant 0 : i32
    return %c0_i32, %c0_i32_0 : i32, i32
  }
  func.func @transform_5(%arg0: i32) -> (i32, i32) {
    %c0_i32 = arith.constant 0 : i32
    %c0_i32_0 = arith.constant 0 : i32
    %c0_i32_1 = arith.constant 0 : i32
    return %c0_i32, %c0_i32_0 : i32, i32
  }
  func.func @transform_6(%arg0: i32) -> (i32, i32) {
    %c0_i32 = arith.constant 0 : i32
    %c0_i32_0 = arith.constant 0 : i32
    %c0_i32_1 = arith.constant 0 : i32
    return %c0_i32, %c0_i32_0 : i32, i32
  }
  func.func @transform_7(%arg0: i32) -> (i32, i32) {
    %c0_i32 = arith.constant 0 : i32
    %c0_i32_0 = arith.constant 0 : i32
    return %c0_i32, %arg0 : i32, i32
  }
}

</mosaic_0001>

<llo_original>
// kernel: irrigation_nn_forward.1
$region0: #{irrigation_nn_forward.1}
  #allocation0 [shape = 'u32[]', space=smem, size = 0x4, offset = 0x4, fixed_abs, tag = 'smem constant byte address 0x4 - core index']
  #allocation1 [shape = 'u32[144,128]{1,0:T(1,128)}', space=vmem, size = 0x12000, scoped, tag = 'internal scratch']
  #allocation2 [shape = 'f32[1,1]{1,0:T(1,128)S(1)}', space=vmem, size = 0x200, scoped, tag = 'scoped memory for irrigation_nn_forward.1']
  %s0 = inlined_call_operand.vmem [shape: f32[3,128], index: 0, kind: input, shape index: {}]
  %s1 = inlined_call_operand.vmem [shape: f32[16,3], index: 1, kind: input, shape index: {}]
  %s2 = inlined_call_operand.vmem [shape: f32[16,1], index: 2, kind: input, shape index: {}]
  %s3 = inlined_call_operand.vmem [shape: f32[8,16], index: 3, kind: input, shape index: {}]
  %s4 = inlined_call_operand.vmem [shape: f32[8,1], index: 4, kind: input, shape index: {}]
  %s5 = inlined_call_operand.vmem [shape: f32[1,8], index: 5, kind: input, shape index: {}]
  %s6 = inlined_call_operand.<no memory space> [shape: f32[1,1], index: 6, kind: input, shape index: {}]
  %s7 = inlined_call_operand.vmem [shape: f32[1,128], index: 7, kind: output, shape index: {}]
  %s8 = sld [smem:[#allocation0]]
  $region38: #{irrigation_nn_forward.1} parent=0
    _
  %s10 = ssub.s32 1, %s8
  %s11 = scalar_select 0, %s10, %s8
  %v12 = vstv %s6
  %13 = vst [vmem:[#allocation2] sm:$0x1] %v12
  // Predicated region
  $region2: #{irrigation_nn_forward.1} parent=0 // pred_check
    _
  $region3: #{irrigation_nn_forward.1} parent=0 // pred_check_branch
    %15 = sbr.rel (0) target = $region5
  $region4: #{irrigation_nn_forward.1} parent=0 // pred_region
    _
  $region5: #{irrigation_nn_forward.1} parent=0 // pred_fallthru
    _
  // Predicated region
  $region6: #{irrigation_nn_forward.1} parent=0 // pred_check
    _
  $region7: #{irrigation_nn_forward.1} parent=0 // pred_check_branch
    %17 = sbr.rel (0) target = $region9
  $region8: #{irrigation_nn_forward.1} parent=0 // pred_region
    _
  $region9: #{irrigation_nn_forward.1} parent=0 // pred_fallthru
    _
  // Predicated region
  $region10: #{irrigation_nn_forward.1} parent=0 // pred_check
    _
  $region11: #{irrigation_nn_forward.1} parent=0 // pred_check_branch
    %19 = sbr.rel (0) target = $region13
  $region12: #{irrigation_nn_forward.1} parent=0 // pred_region
    _
  $region13: #{irrigation_nn_forward.1} parent=0 // pred_fallthru
    _
  // Predicated region
  $region14: #{irrigation_nn_forward.1} parent=0 // pred_check
    _
  $region15: #{irrigation_nn_forward.1} parent=0 // pred_check_branch
    %21 = sbr.rel (0) target = $region17
  $region16: #{irrigation_nn_forward.1} parent=0 // pred_region
    _
  $region17: #{irrigation_nn_forward.1} parent=0 // pred_fallthru
    _
  // Predicated region
  $region18: #{irrigation_nn_forward.1} parent=0 // pred_check
    _
  $region19: #{irrigation_nn_forward.1} parent=0 // pred_check_branch
    %23 = sbr.rel (0) target = $region21
  $region20: #{irrigation_nn_forward.1} parent=0 // pred_region
    _
  $region21: #{irrigation_nn_forward.1} parent=0 // pred_fallthru
    _
  // Predicated region
  $region22: #{irrigation_nn_forward.1} parent=0 // pred_check
    _
  $region23: #{irrigation_nn_forward.1} parent=0 // pred_check_branch
    %25 = sbr.rel (0) target = $region25
  $region24: #{irrigation_nn_forward.1} parent=0 // pred_region
    _
  $region25: #{irrigation_nn_forward.1} parent=0 // pred_fallthru
    _
  // Predicated region
  $region26: #{irrigation_nn_forward.1} parent=0 // pred_check
    _
  $region27: #{irrigation_nn_forward.1} parent=0 // pred_check_branch
    %27 = sbr.rel (0) target = $region29
  $region28: #{irrigation_nn_forward.1} parent=0 // pred_region
    _
  $region29: #{irrigation_nn_forward.1} parent=0 // pred_fallthru
    _
  %v28 = vld [vmem:[%s0] sm:$0x7]
  %v29 = vld [vmem:[%s1] sm:$0xff]
  %v30 = vld [vmem:[%s1 + $0x8] sm:$0xff]
  %v31 = vld [vmem:[%s2] sm:$0xff]
  %v32 = vld [vmem:[%s2 + $0x8] sm:$0xff]
  %34 = vset.pattern.permute.xlu0 0
  %35 = vperm.xlu0 %34, %v31
  %v36 = vpop.permute.xlu0 %35
  %39 = vset.pattern.permute.xlu0 0
  %40 = vperm.xlu0 %39, %v32
  %v41 = vpop.permute.xlu0 %40
  %vm43 = vcmask 23552
  %v45 = vsel %vm43, %v29, 0
  %v48 = vsel %vm43, %v30, 0
  %vm50 = vcmask 1042432
  %v52 = vsel %vm50, %v28, 0
  %54 = vmatprep.subr.mxu0 0.0
  %55 = vmatpush1.msra.mxu0 %v52
  %56 = vmatprep.subr.mxu0 0.0
  %57 = vmatpush1.msra.mxu0 0.0
  %58 = vmatprep.subr.mxu0 0.0
  %59 = vmatpush1.msra.mxu0 0.0
  %60 = vmatprep.subr.mxu0 0.0
  %61 = vmatpush1.msra.mxu0 0.0
  %62 = vmatprep.subr.mxu0 0.0
  %63 = vmatpush1.msra.mxu0 0.0
  %64 = vmatprep.subr.mxu0 0.0
  %65 = vmatpush1.msra.mxu0 0.0
  %66 = vmatprep.subr.mxu0 0.0
  %67 = vmatpush1.msra.mxu0 0.0
  %68 = vmatprep.subr.mxu0 0.0
  %69 = vmatpush1.msra.mxu0 0.0
  %70 = vmatprep.subr.mxu0 0.0
  %71 = vmatpush1.msra.mxu0 0.0
  %72 = vmatprep.subr.mxu0 0.0
  %73 = vmatpush1.msra.mxu0 0.0
  %74 = vmatprep.subr.mxu0 0.0
  %75 = vmatpush1.msra.mxu0 0.0
  %76 = vmatprep.subr.mxu0 0.0
  %77 = vmatpush1.msra.mxu0 0.0
  %78 = vmatprep.subr.mxu0 0.0
  %79 = vmatpush1.msra.mxu0 0.0
  %80 = vmatprep.subr.mxu0 0.0
  %81 = vmatpush1.msra.mxu0 0.0
  %82 = vmatprep.subr.mxu0 0.0
  %83 = vmatpush1.msra.mxu0 0.0
  %84 = vmatprep.subr.mxu0 0.0
  %85 = vmatpush1.msra.mxu0 0.0
  %86 = vmatprep.subr.mxu0 0.0
  %87 = vmatpush1.msra.mxu0 0.0
  %88 = vmatprep.subr.mxu0 0.0
  %89 = vmatpush1.msra.mxu0 0.0
  %90 = vmatprep.subr.mxu0 0.0
  %91 = vmatpush1.msra.mxu0 0.0
  %92 = vmatprep.subr.mxu0 0.0
  %93 = vmatpush1.msra.mxu0 0.0
  %94 = vmatprep.subr.mxu0 0.0
  %95 = vmatpush1.msra.mxu0 0.0
  %96 = vmatprep.subr.mxu0 0.0
  %97 = vmatpush1.msra.mxu0 0.0
  %98 = vmatprep.subr.mxu0 0.0
  %99 = vmatpush1.msra.mxu0 0.0
  %100 = vmatprep.subr.mxu0 0.0
  %101 = vmatpush1.msra.mxu0 0.0
  %102 = vmatprep.subr.mxu0 0.0
  %103 = vmatpush1.msra.mxu0 0.0
  %104 = vmatprep.subr.mxu0 0.0
  %105 = vmatpush1.msra.mxu0 0.0
  %106 = vmatprep.subr.mxu0 0.0
  %107 = vmatpush1.msra.mxu0 0.0
  %108 = vmatprep.subr.mxu0 0.0
  %109 = vmatpush1.msra.mxu0 0.0
  %110 = vmatprep.subr.mxu0 0.0
  %111 = vmatpush1.msra.mxu0 0.0
  %112 = vmatprep.subr.mxu0 0.0
  %113 = vmatpush1.msra.mxu0 0.0
  %114 = vmatprep.subr.mxu0 0.0
  %115 = vmatpush1.msra.mxu0 0.0
  %116 = vmatprep.subr.mxu0 0.0
  %117 = vmatpush1.msra.mxu0 0.0
  %118 = vmatprep.mubr.f32.mxu0 0.0
  %119 = vmatmul.mubr.f32.gmra.mrb[0].mxu0 %v45
  %v120 = vpop.f32.mrb[0].mxu0
  %v121 = vadd.f32 %v36, %v120
  %v122 = vpop.f32.mrb[0].mxu0
  %123 = vmatprep.mubr.f32.mxu0 0.0
  %124 = vmatmul.mubr.f32.gmra.mrb[0].mxu0 %v48
  %v125 = vpop.f32.mrb[0].mxu0
  %v126 = vadd.f32 %v41, %v125
  %v127 = vpop.f32.mrb[0].mxu0
  %128 = vdwg.mxu0
  %v129 = vmax.f32 %v121, 0.0
  %v130 = vmax.f32 %v126, 0.0
  %v131 = vld [vmem:[%s3] sm:$0xff]
  %v132 = vld [vmem:[%s4] sm:$0xff]
  %134 = vset.pattern.permute.xlu0 0
  %135 = vperm.xlu0 %134, %v132
  %v136 = vpop.permute.xlu0 %135
  %vm138 = vcmask 130048
  %v140 = vsel %vm138, %v131, 0
  %142 = vmatprep.subr.mxu0 0.0
  %143 = vmatpush1.msra.mxu0 %v129
  %144 = vmatprep.subr.mxu0 0.0
  %145 = vmatpush1.msra.mxu0 %v130
  %146 = vmatprep.subr.mxu0 0.0
  %147 = vmatpush1.msra.mxu0 0.0
  %148 = vmatprep.subr.mxu0 0.0
  %149 = vmatpush1.msra.mxu0 0.0
  %150 = vmatprep.subr.mxu0 0.0
  %151 = vmatpush1.msra.mxu0 0.0
  %152 = vmatprep.subr.mxu0 0.0
  %153 = vmatpush1.msra.mxu0 0.0
  %154 = vmatprep.subr.mxu0 0.0
  %155 = vmatpush1.msra.mxu0 0.0
  %156 = vmatprep.subr.mxu0 0.0
  %157 = vmatpush1.msra.mxu0 0.0
  %158 = vmatprep.subr.mxu0 0.0
  %159 = vmatpush1.msra.mxu0 0.0
  %160 = vmatprep.subr.mxu0 0.0
  %161 = vmatpush1.msra.mxu0 0.0
  %162 = vmatprep.subr.mxu0 0.0
  %163 = vmatpush1.msra.mxu0 0.0
  %164 = vmatprep.subr.mxu0 0.0
  %165 = vmatpush1.msra.mxu0 0.0
  %166 = vmatprep.subr.mxu0 0.0
  %167 = vmatpush1.msra.mxu0 0.0
  %168 = vmatprep.subr.mxu0 0.0
  %169 = vmatpush1.msra.mxu0 0.0
  %170 = vmatprep.subr.mxu0 0.0
  %171 = vmatpush1.msra.mxu0 0.0
  %172 = vmatprep.subr.mxu0 0.0
  %173 = vmatpush1.msra.mxu0 0.0
  %174 = vmatprep.subr.mxu0 0.0
  %175 = vmatpush1.msra.mxu0 0.0
  %176 = vmatprep.subr.mxu0 0.0
  %177 = vmatpush1.msra.mxu0 0.0
  %178 = vmatprep.subr.mxu0 0.0
  %179 = vmatpush1.msra.mxu0 0.0
  %180 = vmatprep.subr.mxu0 0.0
  %181 = vmatpush1.msra.mxu0 0.0
  %182 = vmatprep.subr.mxu0 0.0
  %183 = vmatpush1.msra.mxu0 0.0
  %184 = vmatprep.subr.mxu0 0.0
  %185 = vmatpush1.msra.mxu0 0.0
  %186 = vmatprep.subr.mxu0 0.0
  %187 = vmatpush1.msra.mxu0 0.0
  %188 = vmatprep.subr.mxu0 0.0
  %189 = vmatpush1.msra.mxu0 0.0
  %190 = vmatprep.subr.mxu0 0.0
  %191 = vmatpush1.msra.mxu0 0.0
  %192 = vmatprep.subr.mxu0 0.0
  %193 = vmatpush1.msra.mxu0 0.0
  %194 = vmatprep.subr.mxu0 0.0
  %195 = vmatpush1.msra.mxu0 0.0
  %196 = vmatprep.subr.mxu0 0.0
  %197 = vmatpush1.msra.mxu0 0.0
  %198 = vmatprep.subr.mxu0 0.0
  %199 = vmatpush1.msra.mxu0 0.0
  %200 = vmatprep.subr.mxu0 0.0
  %201 = vmatpush1.msra.mxu0 0.0
  %202 = vmatprep.subr.mxu0 0.0
  %203 = vmatpush1.msra.mxu0 0.0
  %204 = vmatprep.subr.mxu0 0.0
  %205 = vmatpush1.msra.mxu0 0.0
  %206 = vmatprep.mubr.f32.mxu0 0.0
  %207 = vmatmul.mubr.f32.gmra.mrb[0].mxu0 %v140
  %v208 = vpop.f32.mrb[0].mxu0
  %v209 = vadd.f32 %v136, %v208
  %v210 = vpop.f32.mrb[0].mxu0
  %211 = vdwg.mxu0
  %v212 = vmax.f32 %v209, 0.0
  %v213 = vld [vmem:[%s5] sm:$0x1]
  %v214 = vld [vmem:[#allocation2] sm:$0x1]
  %216 = vset.pattern.permute.xlu0 0
  %217 = vperm.xlu0 %216, %v214
  %v218 = vpop.permute.xlu0 %217
  %v220 = vlaneseq
  %v221 = vshrl.u32 %v220, 7
  %v222 = vsub.s32 0, %v221
  %v223 = vrot.slane %v218, %v222
  %vm224 = vcmask 64512
  %v226 = vsel %vm224, %v213, 0
  %228 = vmatprep.subr.mxu0 0.0
  %229 = vmatpush1.msra.mxu0 %v212
  %230 = vmatprep.subr.mxu0 0.0
  %231 = vmatpush1.msra.mxu0 0.0
  %232 = vmatprep.subr.mxu0 0.0
  %233 = vmatpush1.msra.mxu0 0.0
  %234 = vmatprep.subr.mxu0 0.0
  %235 = vmatpush1.msra.mxu0 0.0
  %236 = vmatprep.subr.mxu0 0.0
  %237 = vmatpush1.msra.mxu0 0.0
  %238 = vmatprep.subr.mxu0 0.0
  %239 = vmatpush1.msra.mxu0 0.0
  %240 = vmatprep.subr.mxu0 0.0
  %241 = vmatpush1.msra.mxu0 0.0
  %242 = vmatprep.subr.mxu0 0.0
  %243 = vmatpush1.msra.mxu0 0.0
  %244 = vmatprep.subr.mxu0 0.0
  %245 = vmatpush1.msra.mxu0 0.0
  %246 = vmatprep.subr.mxu0 0.0
  %247 = vmatpush1.msra.mxu0 0.0
  %248 = vmatprep.subr.mxu0 0.0
  %249 = vmatpush1.msra.mxu0 0.0
  %250 = vmatprep.subr.mxu0 0.0
  %251 = vmatpush1.msra.mxu0 0.0
  %252 = vmatprep.subr.mxu0 0.0
  %253 = vmatpush1.msra.mxu0 0.0
  %254 = vmatprep.subr.mxu0 0.0
  %255 = vmatpush1.msra.mxu0 0.0
  %256 = vmatprep.subr.mxu0 0.0
  %257 = vmatpush1.msra.mxu0 0.0
  %258 = vmatprep.subr.mxu0 0.0
  %259 = vmatpush1.msra.mxu0 0.0
  %260 = vmatprep.subr.mxu0 0.0
  %261 = vmatpush1.msra.mxu0 0.0
  %262 = vmatprep.subr.mxu0 0.0
  %263 = vmatpush1.msra.mxu0 0.0
  %264 = vmatprep.subr.mxu0 0.0
  %265 = vmatpush1.msra.mxu0 0.0
  %266 = vmatprep.subr.mxu0 0.0
  %267 = vmatpush1.msra.mxu0 0.0
  %268 = vmatprep.subr.mxu0 0.0
  %269 = vmatpush1.msra.mxu0 0.0
  %270 = vmatprep.subr.mxu0 0.0
  %271 = vmatpush1.msra.mxu0 0.0
  %272 = vmatprep.subr.mxu0 0.0
  %273 = vmatpush1.msra.mxu0 0.0
  %274 = vmatprep.subr.mxu0 0.0
  %275 = vmatpush1.msra.mxu0 0.0
  %276 = vmatprep.subr.mxu0 0.0
  %277 = vmatpush1.msra.mxu0 0.0
  %278 = vmatprep.subr.mxu0 0.0
  %279 = vmatpush1.msra.mxu0 0.0
  %280 = vmatprep.subr.mxu0 0.0
  %281 = vmatpush1.msra.mxu0 0.0
  %282 = vmatprep.subr.mxu0 0.0
  %283 = vmatpush1.msra.mxu0 0.0
  %284 = vmatprep.subr.mxu0 0.0
  %285 = vmatpush1.msra.mxu0 0.0
  %286 = vmatprep.subr.mxu0 0.0
  %287 = vmatpush1.msra.mxu0 0.0
  %288 = vmatprep.subr.mxu0 0.0
  %289 = vmatpush1.msra.mxu0 0.0
  %290 = vmatprep.subr.mxu0 0.0
  %291 = vmatpush1.msra.mxu0 0.0
  %292 = vmatprep.mubr.f32.mxu0 0.0
  %293 = vmatmul.mubr.f32.gmra.mrb[0].mxu0 %v226
  %v294 = vpop.f32.mrb[0].mxu0
  %v295 = vadd.f32 %v223, %v294
  %v296 = vpop.f32.mrb[0].mxu0
  %297 = vdwg.mxu0
  %v298 = vxor.u32 %v295, 2147483648
  %v299 = vmul.f32 %v298, 1.442695
  %v300 = vpow.pop %v299
  %v301 = vadd.f32 %v300, 1.0
  %v302 = vrcp.pop %v301
  %v303 = vmul.f32 1.0, %v302
  %304 = vst [vmem:[%s7] sm:$0x1] %v303
  // Predicated region
  $region30: #{irrigation_nn_forward.1} parent=0 // pred_check
    _
  $region31: #{irrigation_nn_forward.1} parent=0 // pred_check_branch
    %306 = sbr.rel (0) target = $region33
  $region32: #{irrigation_nn_forward.1} parent=0 // pred_region
    _
  $region33: #{irrigation_nn_forward.1} parent=0 // pred_fallthru
    _
  // Predicated region
  $region34: #{irrigation_nn_forward.1} parent=0 // pred_check
    _
  $region35: #{irrigation_nn_forward.1} parent=0 // pred_check_branch
    %308 = sbr.rel (0) target = $region37
  $region36: #{irrigation_nn_forward.1} parent=0 // pred_region
    _
  $region37: #{irrigation_nn_forward.1} parent=0 // pred_fallthru
    _

</llo_original>
